<compile_context>
chip_gen: v7x
topology: tpu7x:2x2x1
jax: 0.10.0
libtpu: 0.0.40
codegen_flags: <defaults>
</compile_context>

<pallas_src>
import math

import jax
import jax.numpy as jnp
from jax.experimental import pallas as pl
from jax.experimental.pallas import tpu as pltpu


_TARGET_BLOCK_BYTES = 2 * 1024 * 1024   # ~2 MiB per block: past the roofline knee
_VMEM_LIMIT_BYTES = 24 * 1024 * 1024    # in+out x double-buffer + headroom


def _copy_kernel(x_ref, o_ref):
    # Pure identity copy of the current (block_rows, lanes) tile.
    o_ref[...] = x_ref[...]


def _sublanes_per_vreg(itemsize):
    # 8 for f32, 16 for bf16, 32 for int8 (sub-32-bit packs along sublanes).
    return max(8, 32 // itemsize)


def _choose_dense_tiling(total, itemsize):
    """Pick (rows, lanes, block_rows) for a dense 2D copy of `total` elements.

    Requires total % 128 == 0.  Prefers a lane width whose row count is
    sublane-aligned (full vregs, unmasked stores), then the largest lane width.
    """
    assert total % 128 == 0
    sub = _sublanes_per_vreg(itemsize)
    candidates = (8192, 4096, 2048, 1024, 512, 256, 128)

    lanes = None
    for cand in candidates:                        # sublane-aligned rows first
        if total % cand == 0 and (total // cand) % sub == 0:
            lanes = cand
            break
    if lanes is None:
        for cand in candidates:
            if total % cand == 0:
                lanes = cand
                break
    rows = total // lanes

    max_rows = max(1, _TARGET_BLOCK_BYTES // (lanes * itemsize))
    if rows <= max_rows:
        block_rows = rows                          # single row-block (== full dim)
    else:
        block_rows = None
        r = (max_rows // sub) * sub                # sublane-full block candidates
        while r >= sub:
            if rows % r == 0:
                block_rows = r
                break
            r -= sub
        if block_rows is None:                     # rare: rows not a multiple of sub
            r = max_rows
            while r >= 1:
                if rows % r == 0:
                    block_rows = r
                    break
                r -= 1
    return rows, lanes, block_rows


def unflatten(x, target_shape):
    """Pallas equivalent of UnFlatten.forward: reshape x to (B, *target_shape)."""
    B = x.shape[0]
    n_in = math.prod(x.shape[1:]) if x.ndim > 1 else 1
    n_out = math.prod(target_shape)
    assert n_in == n_out, f"cannot reshape {x.shape} to ({B}, {target_shape})"

    total = B * n_in
    itemsize = jnp.dtype(x.dtype).itemsize
    sub = _sublanes_per_vreg(itemsize)

    x_flat = jnp.reshape(x, (total,))              # metadata-only glue

    # Ragged totals: pad the flat view to a fully aligned length so every
    # block is lane- and sublane-dense; slice the pad off after the copy.
    chunk = 128 * sub
    work_total = total
    if total % 128 != 0:
        work_total = ((total + chunk - 1) // chunk) * chunk
        x_flat = jnp.pad(x_flat, (0, work_total - total))

    rows, lanes, block_rows = _choose_dense_tiling(work_total, itemsize)
    x2d = jnp.reshape(x_flat, (rows, lanes))       # metadata-only glue
    block = (block_rows, lanes)
    grid = (rows // block_rows,)
    block_bytes = block_rows * lanes * itemsize

    y2d = pl.pallas_call(
        _copy_kernel,
        out_shape=jax.ShapeDtypeStruct((rows, lanes), x.dtype),
        grid_spec=pltpu.PrefetchScalarGridSpec(
            num_scalar_prefetch=0,
            grid=grid,
            in_specs=[pl.BlockSpec(block, lambda i: (i, 0))],
            out_specs=pl.BlockSpec(block, lambda i: (i, 0)),
        ),
        compiler_params=pltpu.CompilerParams(
            # Only changes behavior on multi-TC chips (v7x); harmless on v5e/v6e.
            dimension_semantics=("parallel",),
            # 2 arrays x 2 pipeline buffers x block, plus headroom; kept small
            # enough for v5e defaults and v7x's 64 MiB physical VMEM.
            vmem_limit_bytes=max(_VMEM_LIMIT_BYTES, 6 * block_bytes),
        ),
        cost_estimate=pl.CostEstimate(
            flops=0,
            transcendentals=0,
            bytes_accessed=2 * work_total * itemsize,
        ),
    )(x2d)

    y_flat = jnp.reshape(y2d, (work_total,))
    if work_total != total:
        y_flat = y_flat[:total]
    return jnp.reshape(y_flat, (B, *target_shape))  # metadata-only glue


if __name__ == "__main__":
    key = jax.random.PRNGKey(0)

    # Typical VAE-decoder UnFlatten: flat latent of size C*H*W per batch
    # element, un-flattened to (C, H, W) = (4, 16, 16).
    B, C, H, W = 2, 4, 16, 16
    x = jax.random.normal(key, (B, C * H * W), dtype=jnp.float32)
    y = jax.block_until_ready(unflatten(x, (C, H, W)))
    y_ref = jnp.reshape(x, (B, C, H, W))
    assert y.shape == (B, C, H, W)
    assert y.dtype == x.dtype
    assert bool(jnp.array_equal(y, y_ref))

    # Ragged total (B*N not a multiple of 128) exercises the padded path.
    x2 = jax.random.normal(jax.random.PRNGKey(1), (2, 300), dtype=jnp.float32)
    y2 = jax.block_until_ready(unflatten(x2, (12, 25)))
    assert y2.shape == (2, 12, 25)
    assert bool(jnp.array_equal(y2, jnp.reshape(x2, (2, 12, 25))))

    print("KERNEL_OK")
</pallas_src>

<mosaic_0001>
module attributes {stable_mosaic.version = 11 : i64} {
  func.func @_copy_kernel(%arg0: i32, %arg1: memref<8x256xf32, #tpu.memory_space<vmem>>, %arg2: memref<8x256xf32, #tpu.memory_space<vmem>>) attributes {dimension_semantics = [#tpu.dimension_semantics<parallel>], iteration_bounds = array<i64: 1>, scalar_prefetch = 0 : i64, scratch_operands = 0 : i64, tpu.core_type = #tpu.core_type<tc>, window_params = [{transform_indices = @transform_0, window_bounds = array<i64: 8, 256>}, {transform_indices = @transform_1, window_bounds = array<i64: 8, 256>}]} {
    %c0 = arith.constant 0 : index
    %c0_0 = arith.constant 0 : index
    %0 = vector.load %arg1[%c0, %c0_0] : memref<8x256xf32, #tpu.memory_space<vmem>>, vector<8x256xf32>
    %c0_1 = arith.constant 0 : index
    %c0_2 = arith.constant 0 : index
    %1 = vector.load %arg2[%c0_1, %c0_2] : memref<8x256xf32, #tpu.memory_space<vmem>>, vector<8x256xf32>
    tpu.vector_store %arg2[%c0_1, %c0_2], %0 {strides = array<i32>} : memref<8x256xf32, #tpu.memory_space<vmem>>, vector<8x256xf32>,
    return
  }
  func.func @transform_0(%arg0: i32) -> (i32, i32) {
    %c0_i32 = arith.constant 0 : i32
    %c0_i32_0 = arith.constant 0 : i32
    return %arg0, %c0_i32 : i32, i32
  }
  func.func @transform_1(%arg0: i32) -> (i32, i32) {
    %c0_i32 = arith.constant 0 : i32
    %c0_i32_0 = arith.constant 0 : i32
    return %arg0, %c0_i32 : i32, i32
  }
}

</mosaic_0001>

<llo_original>
// kernel: tpu_custom_call.1
$region0: #{tpu_custom_call.1}
  #allocation0 [shape = 'u32[]', space=smem, size = 0x4, offset = 0x4, fixed_abs, tag = 'smem constant byte address 0x4 - core index']
  #allocation1 [shape = 'u32[144,128]{1,0:T(1,128)}', space=vmem, size = 0x12000, scoped, tag = 'internal scratch']
  %s0 = inlined_call_operand.hbm [shape: f32[8,256], index: 0, kind: input, shape index: {}]
  %s1 = inlined_call_operand.hbm [shape: f32[8,256], index: 1, kind: output, shape index: {}]
  %s2 = sld [smem:[#allocation0]]
  $region18: #{tpu_custom_call.1} parent=0
    _
  %s4 = ssub.s32 1, %s2
  %s5 = scalar_select 0, %s4, %s2
  $region1: #{tpu_custom_call.1} parent=0
    #allocation2 [shape = 'u8[8192]{0}', space=vmem, size = 0x2000, scoped, tag = 'input window, operand 0, single buffered']
    #allocation3 [shape = 's32[1]{0}', space=sflag, size = 0x4, scoped, tag = 'scoped memory for tpu_custom_call.1']
    #allocation4 [shape = 's32[1]{0}', space=sflag, size = 0x4, scoped, tag = 'scoped memory for tpu_custom_call.1']
    #allocation5 [shape = 'u8[8192]{0}', space=vmem, size = 0x2000, scoped, tag = 'output window, operand 0, single buffered']
    %6 = vsyncpa [#allocation3], 0
    %7 = vsyncpa [#allocation4], 0
    // Predicated region
    $region2: #{tpu_custom_call.1} parent=1 // pred_check
      _
    $region3: #{tpu_custom_call.1} parent=1 // pred_check_branch
      %9 = sbr.rel (0) target = $region5
    $region4: #{tpu_custom_call.1} parent=1 // pred_region
      %s11 = ssub.s32 256, 256
      %12 = vsyncadd [#allocation3], %s11
      %s14 = sshll.u32 [#allocation2], 4
      %s15 = int_to_ptr.vmem [resolvable:$true] %s14
      %17 = dma.hbm_to_vmem [thread:$0]  %s0, 256, %s15, [#allocation3]
    $region5: #{tpu_custom_call.1} parent=1 // pred_fallthru
      _
    // Predicated region
    $region6: #{tpu_custom_call.1} parent=1 // pred_check
      _
    $region7: #{tpu_custom_call.1} parent=1 // pred_check_branch
      %19 = sbr.rel (0) target = $region9
    $region8: #{tpu_custom_call.1} parent=1 // pred_region
      %20 = dma.done [#allocation3], 256
    $region9: #{tpu_custom_call.1} parent=1 // pred_fallthru
      _
    %v21 = vld [vmem:[#allocation2] sm:$0xff]
    %v22 = vld [vmem:[#allocation2 + $0x8] sm:$0xff]
    %23 = vst [vmem:[#allocation5] sm:$0xff] %v21
    %24 = vst [vmem:[#allocation5 + $0x8] sm:$0xff] %v22
    // Predicated region
    $region10: #{tpu_custom_call.1} parent=1 // pred_check
      _
    $region11: #{tpu_custom_call.1} parent=1 // pred_check_branch
      %26 = sbr.rel (0) target = $region13
    $region12: #{tpu_custom_call.1} parent=1 // pred_region
      %s28 = ssub.s32 256, 256
      %29 = vsyncadd [#allocation4], %s28
      %s31 = sshll.u32 [#allocation5], 4
      %s32 = int_to_ptr.vmem [resolvable:$true] %s31
      %34 = dma.vmem_to_hbm [thread:$0]  %s32, 256, %s1, [#allocation4]
    $region13: #{tpu_custom_call.1} parent=1 // pred_fallthru
      _
    // Predicated region
    $region14: #{tpu_custom_call.1} parent=1 // pred_check
      _
    $region15: #{tpu_custom_call.1} parent=1 // pred_check_branch
      %36 = sbr.rel (0) target = $region17
    $region16: #{tpu_custom_call.1} parent=1 // pred_region
      %37 = dma.done [#allocation4], 256
    $region17: #{tpu_custom_call.1} parent=1 // pred_fallthru
      _
    %38 = vsyncpa [#allocation3], 1
    %39 = vsyncpa [#allocation4], 1

</llo_original>
